<compile_context>
chip_gen: v5e
topology: v5e:2x2
jax: 0.10.0
libtpu: 0.0.40
codegen_flags: <defaults>
</compile_context>

<pallas_src>
import functools
import math

import jax
import jax.numpy as jnp
import numpy as np
from jax.experimental import pallas as pl
from jax.experimental.pallas import tpu as pltpu

NEG_SLOPE = 0.01   # nn.LeakyReLU default
BN_EPS = 1e-5      # nn.BatchNorm2d default


def _round_up(x, m):
    return (x + m - 1) // m * m


def _vmem_budget_and_limit():
    """Per-generation VMEM budget for the pipelined tiles.

    v5e/v6e have 128 MiB VMEM per TensorCore, v7x only 64 MiB -> size the
    double-buffered working set to ~cap/4 and raise the scoped-VMEM limit
    (v5e defaults to 16 MiB) accordingly.
    """
    try:
        cap = int(pltpu.get_tpu_info().vmem_capacity_bytes)
    except Exception:   # info unavailable at trace time -> conservative (v7x)
        cap = 64 * 1024 * 1024
    budget = max(8 << 20, min(cap // 4, 32 << 20))
    limit = max(32 << 20, min((cap * 3) // 4, 3 * budget))
    return budget, limit


def _upsample_kernel(a0_ref, a1_ref, w_ref, act_ref, stats_ref, *,
                     w_cols, last_valid, needs_mask):
    """Fused ConvTranspose2d(3, s=2, p=1, op=1) + bias + LeakyReLU + BN partials.

    a0_ref : (C_in, tile_s)   input row m            (channels on sublanes,
    a1_ref : (C_in, tile_s)   input row m+1 (0-pad)   flat (n,m,w) on lanes)
    w_ref  : (4*C_out, 4*C_in + 1)  phase-major taps, bias folded in last col
    act_ref: (4*C_out, tile_s)      pre-BN activation, phase-major rows
    stats_ref: (4*C_out, 2)         per-tile [sum, sum sq. deviations]
    """
    tile_s = a0_ref.shape[-1]
    a0 = a0_ref[...]
    a1 = a1_ref[...]

    # dx=+1 taps: shift one column left inside every W-wide row segment.  The
    # wrapped / row-crossing positions are exactly w == W-1, i.e. the conv's
    # right zero pad -> mask them.  (Tap gather fused in-kernel: no HBM
    # patch matrix.)
    lane = jax.lax.broadcasted_iota(jnp.int32, (1, tile_s), 1)
    in_row = (lane % w_cols) != (w_cols - 1)

    def shift_left(v):
        rolled = jnp.concatenate([v[:, 1:], v[:, :1]], axis=1)
        return jnp.where(in_row, rolled, jnp.zeros_like(rolled))

    ones = jnp.ones((1, tile_s), dtype=a0.dtype)                 # bias row
    taps = jnp.concatenate([a0, shift_left(a0), a1, shift_left(a1), ones],
                           axis=0)                               # (4*C_in+1, t)

    y = jnp.dot(w_ref[...], taps, preferred_element_type=jnp.float32)
    y = jnp.where(y >= 0.0, y, NEG_SLOPE * y)                    # LeakyReLU
    act_ref[...] = y.astype(act_ref.dtype)                       # lane-dense

    # Training-mode BatchNorm partials: per (phase, channel) row emit the sum
    # and the sum of squared deviations about the *tile* mean; tiles are
    # combined with Chan's formula in the wrapper.  Padded-column masking is
    # gated to the last grid step only.
    def full_stats():
        s = jnp.sum(y, axis=1, keepdims=True)
        mu = s * (1.0 / tile_s)
        d = y - mu
        q = jnp.sum(d * d, axis=1, keepdims=True)
        stats_ref[...] = jnp.concatenate([s, q], axis=1)

    if not needs_mask:                    # static: no padded columns anywhere
        full_stats()
    else:
        last = pl.num_programs(0) - 1

        @pl.when(pl.program_id(0) != last)
        def _():
            full_stats()

        @pl.when(pl.program_id(0) == last)
        def _():
            valid = lane < last_valid
            ym = jnp.where(valid, y, 0.0)
            s = jnp.sum(ym, axis=1, keepdims=True)
            mu = s * (1.0 / last_valid)
            d = jnp.where(valid, ym - mu, 0.0)
            q = jnp.sum(d * d, axis=1, keepdims=True)
            stats_ref[...] = jnp.concatenate([s, q], axis=1)


@functools.partial(jax.jit, static_argnames=("is_drop", "store_dtype"))
def upsample_forward(x, weight, bias, gamma, beta, *, is_drop=False,
                     store_dtype=jnp.float32):
    """x: (N, C_in, H, W) f32.  weight: (C_in, C_out, 3, 3) (PyTorch layout).
    Returns (N, C_out, 2H, 2W) f32."""
    N, C_in, H, W = x.shape
    C_out = weight.shape[1]
    H_out, W_out = 2 * H, 2 * W            # (H-1)*2 - 2*1 + 3 + 1 = 2H
    S = N * H * W
    cdt = store_dtype
    in_bytes = np.dtype(cdt).itemsize
    k_dim = 4 * C_in + 1                   # 4 taps * C_in + bias row

    # ---- column tiling: VMEM-budget derived, >= 2 tiles when possible -------
    col_align = math.lcm(W, 128)           # lane constraint + row boundaries
    budget, vmem_limit = _vmem_budget_and_limit()
    fixed = (2 * (4 * C_out) * k_dim * in_bytes     # resident weight (2 bufs)
             + 4 * (4 * C_out) * 2 * 4              # stats blocks
             + (1 << 20))                           # slack
    per_col = (4 * C_in * in_bytes                  # a0+a1 blocks, 2 buffers
               + 8 * C_out * in_bytes               # act block, 2 buffers
               + (k_dim + 2 * C_in) * in_bytes      # in-kernel tap stack
               + 16 * C_out)                        # f32 matmul result
    avail = max(budget - fixed, per_col * col_align)
    budget_cols = max((avail // per_col) // col_align * col_align, col_align)
    S_ceil = _round_up(S, col_align)
    tile_s = min(budget_cols, S_ceil)
    if S_ceil >= 2 * col_align:            # split for megacore / pipelining
        tile_s = min(tile_s, _round_up(S_ceil // 2, col_align))
    assert tile_s % W == 0
    S_pad = _round_up(S, tile_s)
    num_tiles = S_pad // tile_s
    needs_mask = S_pad != S
    last_valid = S - (num_tiles - 1) * tile_s

    # ---- glue: two channel-major input views (row m and row m+1) ------------
    xf = x.astype(cdt)
    a0 = jnp.transpose(xf, (1, 0, 2, 3)).reshape(C_in, S)
    x_below = jnp.concatenate(
        [xf[:, :, 1:, :], jnp.zeros((N, C_in, 1, W), cdt)], axis=2)
    a1 = jnp.transpose(x_below, (1, 0, 2, 3)).reshape(C_in, S)
    if S_pad != S:
        pad = ((0, 0), (0, S_pad - S))
        a0 = jnp.pad(a0, pad)
        a1 = jnp.pad(a1, pad)

    # ---- glue: phase/tap weight matrix (bias folded as last column) ---------
    # Output phase p = py*2+px owns pixel (2m+py, 2w+px); tap t = dy*2+dx reads
    # x[m+dy, w+dx].  Matching ConvTranspose kernel element:
    #   ky = 1 (py=0,dy=0) / 2 (py=1,dy=0) / 0 (py=1,dy=1); same rule for kx.
    def _k(parity, d):
        if parity == 0:
            return 1 if d == 0 else None
        return 2 if d == 0 else 0

    wf = weight.astype(jnp.float32)
    w_t = jnp.zeros((4 * C_out, 4 * C_in), jnp.float32)
    for py in (0, 1):
        for px in (0, 1):
            p = py * 2 + px
            for dy in (0, 1):
                for dx in (0, 1):
                    ky, kx = _k(py, dy), _k(px, dx)
                    if ky is None or kx is None:
                        continue
                    t = dy * 2 + dx
                    w_t = w_t.at[p * C_out:(p + 1) * C_out,
                                 t * C_in:(t + 1) * C_in].set(wf[:, :, ky, kx].T)
    b_col = jnp.tile(bias.astype(jnp.float32), 4).reshape(4 * C_out, 1)
    w_aug = jnp.concatenate([w_t, b_col], axis=1).astype(cdt)

    # ---- Pallas: fused tap-gather + matmul + bias + LeakyReLU + BN partials -
    cost = pl.CostEstimate(
        flops=2 * (4 * C_out) * k_dim * S_pad,
        transcendentals=0,
        bytes_accessed=(2 * C_in * S_pad * in_bytes        # a0 + a1
                        + (4 * C_out) * k_dim * in_bytes   # weight
                        + 4 * C_out * S_pad * in_bytes     # act
                        + num_tiles * 4 * C_out * 2 * 4))  # stats

    act, stats = pl.pallas_call(
        functools.partial(_upsample_kernel, w_cols=W, last_valid=last_valid,
                          needs_mask=needs_mask),
        out_shape=(jax.ShapeDtypeStruct((4 * C_out, S_pad), cdt),
                   jax.ShapeDtypeStruct((num_tiles, 4 * C_out, 2), jnp.float32)),
        grid=(num_tiles,),
        in_specs=[pl.BlockSpec((C_in, tile_s), lambda j: (0, j)),
                  pl.BlockSpec((C_in, tile_s), lambda j: (0, j)),
                  pl.BlockSpec((4 * C_out, k_dim), lambda j: (0, 0))],
        out_specs=(pl.BlockSpec((4 * C_out, tile_s), lambda j: (0, j)),
                   pl.BlockSpec((None, 4 * C_out, 2), lambda j: (j, 0, 0))),
        compiler_params=pltpu.CompilerParams(
            dimension_semantics=("parallel",),      # no revisited accumulators
            vmem_limit_bytes=int(vmem_limit)),
        cost_estimate=cost,
    )(a0, a1, w_aug)

    # ---- glue: BN stats via Chan's parallel-variance combine ----------------
    counts = [float(tile_s)] * num_tiles
    counts[-1] = float(last_valid)
    cnt = jnp.asarray(counts, jnp.float32).reshape(num_tiles, 1, 1)
    sums = stats[:, :, 0].reshape(num_tiles, 4, C_out)
    m2s = stats[:, :, 1].reshape(num_tiles, 4, C_out)
    total = float(4 * S)                              # = N * H_out * W_out
    mean = jnp.sum(sums, axis=(0, 1)) / total         # (C_out,)
    mean_g = sums / cnt
    m2_tot = jnp.sum(m2s + cnt * (mean_g - mean) ** 2, axis=(0, 1))
    var = m2_tot / total                              # biased, as PyTorch
    inv_std = jax.lax.rsqrt(var + BN_EPS)
    scale = gamma.astype(jnp.float32) * inv_std
    shift = beta.astype(jnp.float32) - mean * scale

    # ---- glue: phase interleave + NCHW + fused BN affine (one XLA fusion) ---
    act_v = act[:, :S].astype(jnp.float32).reshape(2, 2, C_out, N, H, W)
    act_v = jnp.transpose(act_v, (3, 2, 4, 0, 5, 1)).reshape(N, C_out, H_out, W_out)
    out = act_v * scale.reshape(1, C_out, 1, 1) + shift.reshape(1, C_out, 1, 1)

    # TODO(synk): F.dropout2d (is_drop=True) stochastic channel dropout and the
    # BatchNorm running_mean/running_var buffer updates are not implemented
    # (the module's default forward path is is_drop=False).
    return out


def _reference(x, weight, bias, gamma, beta):
    """Pure-JAX reference (XLA conv) for correctness check."""
    w_oihw = jnp.transpose(weight[:, :, ::-1, ::-1], (1, 0, 2, 3))
    y = jax.lax.conv_general_dilated(
        x, w_oihw, window_strides=(1, 1), padding=[(1, 2), (1, 2)],
        lhs_dilation=(2, 2), rhs_dilation=(1, 1),
        dimension_numbers=("NCHW", "OIHW", "NCHW"))
    y = y + bias.reshape(1, -1, 1, 1)
    y = jnp.where(y >= 0.0, y, NEG_SLOPE * y)
    mean = jnp.mean(y, axis=(0, 2, 3), keepdims=True)
    var = jnp.mean((y - mean) ** 2, axis=(0, 2, 3), keepdims=True)
    yhat = (y - mean) * jax.lax.rsqrt(var + BN_EPS)
    return yhat * gamma.reshape(1, -1, 1, 1) + beta.reshape(1, -1, 1, 1)


if __name__ == "__main__":
    def _check(N, C_in, C_out, H, W):
        key = jax.random.PRNGKey(0)
        kx, kw, kb = jax.random.split(key, 3)
        x = jax.random.normal(kx, (N, C_in, H, W), dtype=jnp.float32)
        # ConvTranspose2d weight layout: (in_channels, out_channels, kH, kW)
        weight = 0.1 * jax.random.normal(kw, (C_in, C_out, 3, 3), jnp.float32)
        bias = 0.1 * jax.random.normal(kb, (C_out,), jnp.float32)
        gamma = jnp.ones((C_out,), jnp.float32)    # BN affine init
        beta = jnp.zeros((C_out,), jnp.float32)

        out = upsample_forward(x, weight, bias, gamma, beta, is_drop=False)
        out = jax.block_until_ready(out)
        assert out.shape == (N, C_out, 2 * H, 2 * W)

        ref = jax.block_until_ready(_reference(x, weight, bias, gamma, beta))
        err = jnp.max(jnp.abs(out - ref))
        assert jnp.allclose(out, ref, rtol=1e-3, atol=1e-4), f"max abs err {err}"

    _check(2, 4, 8, 16, 16)   # primary shape: multi-tile grid, no pad columns
    _check(1, 8, 6, 8, 8)     # padded-column / masked-stats (last tile) path
    print("KERNEL_OK")
</pallas_src>

<mosaic_0001>
module attributes {stable_mosaic.version = 11 : i64} {
  func.func @_upsample_kernel(%arg0: i32, %arg1: memref<4x256xf32, #tpu.memory_space<vmem>>, %arg2: memref<4x256xf32, #tpu.memory_space<vmem>>, %arg3: memref<32x17xf32, #tpu.memory_space<vmem>>, %arg4: memref<32x256xf32, #tpu.memory_space<vmem>>, %arg5: memref<1x32x2xf32, #tpu.memory_space<vmem>>) attributes {dimension_semantics = [#tpu.dimension_semantics<parallel>], iteration_bounds = array<i64: 2>, scalar_prefetch = 0 : i64, scratch_operands = 0 : i64, tpu.core_type = #tpu.core_type<tc>, window_params = [{transform_indices = @transform_0, window_bounds = array<i64: 4, 256>}, {transform_indices = @transform_1, window_bounds = array<i64: 4, 256>}, {pipeline_mode = #tpu.pipeline_mode<synchronous>, transform_indices = @transform_2, window_bounds = array<i64: 32, 17>}, {transform_indices = @transform_3, window_bounds = array<i64: 32, 256>}, {transform_indices = @transform_4, window_bounds = array<i64: 1, 32, 2>}]} {
    %c0 = arith.constant 0 : index
    %c0_0 = arith.constant 0 : index
    %0 = vector.load %arg1[%c0, %c0_0] : memref<4x256xf32, #tpu.memory_space<vmem>>, vector<4x256xf32>
    %c0_1 = arith.constant 0 : index
    %c0_2 = arith.constant 0 : index
    %1 = vector.load %arg2[%c0_1, %c0_2] : memref<4x256xf32, #tpu.memory_space<vmem>>, vector<4x256xf32>
    %2 = tpu.iota {dimensions = array<i32: 1>} : vector<1x256xi32>
    %c16_i32 = arith.constant 16 : i32
    %c0_i32 = arith.constant 0 : i32
    %3 = arith.cmpi eq, %c16_i32, %c0_i32 : i32
    %c1_i32 = arith.constant 1 : i32
    %4 = arith.select %3, %c1_i32, %c16_i32 : i32
    %5 = vector.broadcast %4 : i32 to vector<1x256xi32>
    %6 = arith.remsi %2, %5 : vector<1x256xi32>
    %c0_i32_3 = arith.constant 0 : i32
    %7 = vector.broadcast %c0_i32_3 : i32 to vector<1x256xi32>
    %8 = arith.cmpi ne, %6, %7 : vector<1x256xi32>
    %c0_i32_4 = arith.constant 0 : i32
    %9 = vector.broadcast %c0_i32_4 : i32 to vector<1x256xi32>
    %10 = arith.cmpi slt, %6, %9 : vector<1x256xi32>
    %c0_i32_5 = arith.constant 0 : i32
    %11 = arith.cmpi slt, %4, %c0_i32_5 : i32
    %12 = vector.broadcast %11 : i1 to vector<1x256xi1>
    %13 = vector.broadcast %12 : vector<1x256xi1> to vector<1x256xi1>
    %14 = arith.xori %10, %13 : vector<1x256xi1>
    %15 = arith.andi %14, %8 : vector<1x256xi1>
    %16 = vector.broadcast %4 : i32 to vector<1x256xi32>
    %17 = arith.addi %6, %16 : vector<1x256xi32>
    %18 = arith.select %15, %17, %6 : vector<1x256xi1>, vector<1x256xi32>
    %c15_i32 = arith.constant 15 : i32
    %19 = vector.broadcast %c15_i32 : i32 to vector<1x256xi32>
    %20 = arith.cmpi ne, %18, %19 : vector<1x256xi32>
    %cst = arith.constant 1.000000e+00 : f32
    %21 = vector.broadcast %cst : f32 to vector<1x256xf32>
    %22 = vector.extract_strided_slice %0 {offsets = [0, 1], sizes = [4, 255], strides = [1, 1]} : vector<4x256xf32> to vector<4x255xf32>
    %23 = vector.extract_strided_slice %0 {offsets = [0, 0], sizes = [4, 1], strides = [1, 1]} : vector<4x256xf32> to vector<4x1xf32>
    %24 = tpu.concatenate %22, %23 in 1 : vector<4x255xf32>, vector<4x1xf32> -> vector<4x256xf32>
    %cst_6 = arith.constant 0.000000e+00 : f32
    %25 = vector.broadcast %cst_6 : f32 to vector<4x256xf32>
    %26 = vector.shape_cast %20 : vector<1x256xi1> to vector<1x256xi1>
    %27 = vector.broadcast %26 : vector<1x256xi1> to vector<4x256xi1>
    %28 = arith.select %27, %24, %25 : vector<4x256xi1>, vector<4x256xf32>
    %29 = vector.extract_strided_slice %1 {offsets = [0, 1], sizes = [4, 255], strides = [1, 1]} : vector<4x256xf32> to vector<4x255xf32>
    %30 = vector.extract_strided_slice %1 {offsets = [0, 0], sizes = [4, 1], strides = [1, 1]} : vector<4x256xf32> to vector<4x1xf32>
    %31 = tpu.concatenate %29, %30 in 1 : vector<4x255xf32>, vector<4x1xf32> -> vector<4x256xf32>
    %cst_7 = arith.constant 0.000000e+00 : f32
    %32 = vector.broadcast %cst_7 : f32 to vector<4x256xf32>
    %33 = vector.shape_cast %20 : vector<1x256xi1> to vector<1x256xi1>
    %34 = vector.broadcast %33 : vector<1x256xi1> to vector<4x256xi1>
    %35 = arith.select %34, %31, %32 : vector<4x256xi1>, vector<4x256xf32>
    %36 = tpu.concatenate %0, %28, %1, %35, %21 in 0 : vector<4x256xf32>, vector<4x256xf32>, vector<4x256xf32>, vector<4x256xf32>, vector<1x256xf32> -> vector<17x256xf32>
    %c0_8 = arith.constant 0 : index
    %c0_9 = arith.constant 0 : index
    %37 = vector.load %arg3[%c0_8, %c0_9] : memref<32x17xf32, #tpu.memory_space<vmem>>, vector<32x17xf32>
    %cst_10 = arith.constant dense<0.000000e+00> : vector<32x256xf32>
    %38 = tpu.matmul %37, %36, %cst_10 {dimension_numbers = #tpu.dot_dimension_numbers<[1], [0], [0], [1], [0, 0, 1, 1], [], []>} : vector<32x17xf32>, vector<17x256xf32>, vector<32x256xf32> -> vector<32x256xf32>
    %cst_11 = arith.constant 0.000000e+00 : f32
    %39 = vector.broadcast %cst_11 : f32 to vector<32x256xf32>
    %40 = arith.cmpf oge, %38, %39 : vector<32x256xf32>
    %cst_12 = arith.constant 0.00999999977 : f32
    %41 = vector.broadcast %cst_12 : f32 to vector<32x256xf32>
    %42 = arith.mulf %41, %38 : vector<32x256xf32>
    %43 = arith.select %40, %38, %42 : vector<32x256xi1>, vector<32x256xf32>
    %c0_13 = arith.constant 0 : index
    %c0_14 = arith.constant 0 : index
    %44 = vector.load %arg4[%c0_13, %c0_14] : memref<32x256xf32, #tpu.memory_space<vmem>>, vector<32x256xf32>
    tpu.vector_store %arg4[%c0_13, %c0_14], %43 {strides = array<i32>} : memref<32x256xf32, #tpu.memory_space<vmem>>, vector<32x256xf32>,
    %cst_15 = arith.constant dense<0.000000e+00> : vector<32xf32>
    %45 = vector.multi_reduction <add>, %43, %cst_15 [1] : vector<32x256xf32> to vector<32xf32>
    %46 = vector.shape_cast %45 : vector<32xf32> to vector<32x1xf32>
    %cst_16 = arith.constant 3.906250e-03 : f32
    %47 = vector.broadcast %cst_16 : f32 to vector<32x1xf32>
    %48 = arith.mulf %46, %47 : vector<32x1xf32>
    %49 = vector.broadcast %48 : vector<32x1xf32> to vector<32x256xf32>
    %50 = arith.subf %43, %49 : vector<32x256xf32>
    %51 = arith.mulf %50, %50 : vector<32x256xf32>
    %cst_17 = arith.constant dense<0.000000e+00> : vector<32xf32>
    %52 = vector.multi_reduction <add>, %51, %cst_17 [1] : vector<32x256xf32> to vector<32xf32>
    %53 = vector.shape_cast %52 : vector<32xf32> to vector<32x1xf32>
    %54 = tpu.concatenate %46, %53 in 1 : vector<32x1xf32>, vector<32x1xf32> -> vector<32x2xf32>
    %c0_18 = arith.constant 0 : index
    %c0_19 = arith.constant 0 : index
    %c0_20 = arith.constant 0 : index
    %55 = vector.load %arg5[%c0_18, %c0_19, %c0_20] : memref<1x32x2xf32, #tpu.memory_space<vmem>>, vector<1x32x2xf32>
    %56 = vector.shape_cast %55 : vector<1x32x2xf32> to vector<32x2xf32>
    %57 = vector.shape_cast %54 : vector<32x2xf32> to vector<1x32x2xf32>
    tpu.vector_store %arg5[%c0_18, %c0_19, %c0_20], %57 {strides = array<i32>} : memref<1x32x2xf32, #tpu.memory_space<vmem>>, vector<1x32x2xf32>,
    return
  }
  func.func @transform_0(%arg0: i32) -> (i32, i32) {
    %c0_i32 = arith.constant 0 : i32
    %c0_i32_0 = arith.constant 0 : i32
    return %c0_i32, %arg0 : i32, i32
  }
  func.func @transform_1(%arg0: i32) -> (i32, i32) {
    %c0_i32 = arith.constant 0 : i32
    %c0_i32_0 = arith.constant 0 : i32
    return %c0_i32, %arg0 : i32, i32
  }
  func.func @transform_2(%arg0: i32) -> (i32, i32) {
    %c0_i32 = arith.constant 0 : i32
    %c0_i32_0 = arith.constant 0 : i32
    %c0_i32_1 = arith.constant 0 : i32
    return %c0_i32, %c0_i32_0 : i32, i32
  }
  func.func @transform_3(%arg0: i32) -> (i32, i32) {
    %c0_i32 = arith.constant 0 : i32
    %c0_i32_0 = arith.constant 0 : i32
    return %c0_i32, %arg0 : i32, i32
  }
  func.func @transform_4(%arg0: i32) -> (i32, i32, i32) {
    %c0_i32 = arith.constant 0 : i32
    %c0_i32_0 = arith.constant 0 : i32
    %c0_i32_1 = arith.constant 0 : i32
    return %arg0, %c0_i32, %c0_i32_0 : i32, i32, i32
  }
}

</mosaic_0001>

<llo_original>
// kernel: tile.8
$region0: #{tile.8}
  #allocation0 [shape = 's32[1]{0}', space=sflag, size = 0x4, scoped, tag = 'scoped memory for tile.8']
  %s0 = inlined_call_operand.vmem [shape: f32[8], index: 0, kind: input, shape index: {}]
  %s1 = inlined_call_operand.vmem [shape: f32[4,8], index: 1, kind: output, shape index: {}]
  // Predicated region
  $region2: #{tile.8} parent=0 // pred_check
    _
  $region3: #{tile.8} parent=0 // pred_check_branch
    %3 = sbr.rel (0) target = $region5
  $region4: #{tile.8} parent=0 // pred_region
    _
  $region5: #{tile.8} parent=0 // pred_fallthru
    _
  %v4 = vld [vmem:[%s0] ss:$0 sm:$0xff]
  %5 = vst [vmem:[%s1] sm:$0xf] %v4

// kernel: tile.0
$region0: #{tile.0}
  %s0 = inlined_call_operand.vmem [shape: f32[4,8], index: 0, kind: input, shape index: {}]
  %s1 = inlined_call_operand.vmem [shape: f32[32,1], index: 1, kind: output, shape index: {}]
  $region1: #{tile.0} parent=0
    #allocation0 [shape = 'u8[4096]{0}', space=vmem, size = 0x1000, scoped, tag = 'scoped mem for input reshape']
    %s3 = ssub.s32 16, 1
    %v4 = vld [vmem:[%s0] sm:%s3]
    %5 = vst [vmem:[#allocation0] sm:%s3] %v4
    %v6 = vld [vmem:[#allocation0] sm:$0xf]
    %vm7 = vcmask 7168
    %8 = vst.msk [vmem:[%s1] ss:$8 sm:$0xf] %vm7, %v6
    %v9 = vld [vmem:[#allocation0] sm:$0xf]
    %10 = vrot.lane.b32.xlu0 %v9, 127
    %v11 = vpop.permute.xlu0 %10
    %vm12 = vcmask 7168
    %s13 = scalar_lea.vmem %s1, 1
    %14 = vst.msk [vmem:[%s13] ss:$8 sm:$0xf] %vm12, %v11
    %v15 = vld [vmem:[#allocation0] sm:$0xf]
    %16 = vrot.lane.b32.xlu0 %v15, 126
    %v17 = vpop.permute.xlu0 %16
    %vm18 = vcmask 7168
    %s19 = scalar_lea.vmem %s1, 2
    %20 = vst.msk [vmem:[%s19] ss:$8 sm:$0xf] %vm18, %v17
    %v21 = vld [vmem:[#allocation0] sm:$0xf]
    %22 = vrot.lane.b32.xlu0 %v21, 125
    %v23 = vpop.permute.xlu0 %22
    %vm24 = vcmask 7168
    %s25 = scalar_lea.vmem %s1, 3
    %26 = vst.msk [vmem:[%s25] ss:$8 sm:$0xf] %vm24, %v23
    %v27 = vld [vmem:[#allocation0] sm:$0xf]
    %28 = vrot.lane.b32.xlu0 %v27, 124
    %v29 = vpop.permute.xlu0 %28
    %vm30 = vcmask 7168
    %s31 = scalar_lea.vmem %s1, 4
    %32 = vst.msk [vmem:[%s31] ss:$8 sm:$0xf] %vm30, %v29
    %v33 = vld [vmem:[#allocation0] sm:$0xf]
    %34 = vrot.lane.b32.xlu0 %v33, 123
    %v35 = vpop.permute.xlu0 %34
    %vm36 = vcmask 7168
    %s37 = scalar_lea.vmem %s1, 5
    %38 = vst.msk [vmem:[%s37] ss:$8 sm:$0xf] %vm36, %v35
    %v39 = vld [vmem:[#allocation0] sm:$0xf]
    %40 = vrot.lane.b32.xlu0 %v39, 122
    %v41 = vpop.permute.xlu0 %40
    %vm42 = vcmask 7168
    %s43 = scalar_lea.vmem %s1, 6
    %44 = vst.msk [vmem:[%s43] ss:$8 sm:$0xf] %vm42, %v41
    %v45 = vld [vmem:[#allocation0] sm:$0xf]
    %46 = vrot.lane.b32.xlu0 %v45, 121
    %v47 = vpop.permute.xlu0 %46
    %vm48 = vcmask 7168
    %s49 = scalar_lea.vmem %s1, 7
    %50 = vst.msk [vmem:[%s49] ss:$8 sm:$0xf] %vm48, %v47

// kernel: upsample_forward.1
$region0: #{upsample_forward.1}
  #allocation0 [shape = 'u32[]', space=smem, size = 0x4, offset = 0x4, fixed_abs, tag = 'smem constant byte address 0x4 - core index']
  #allocation1 [shape = 'u32[72,128]{1,0:T(1,128)}', space=vmem, size = 0x9000, scoped, tag = 'internal scratch']
  %s0 = inlined_call_operand.vmem [shape: f32[4,512], index: 0, kind: input, shape index: {}]
  %s1 = inlined_call_operand.vmem [shape: f32[4,512], index: 1, kind: input, shape index: {}]
  %s2 = inlined_call_operand.vmem [shape: f32[32,17], index: 2, kind: input, shape index: {}]
  %s3 = inlined_call_operand.vmem [shape: f32[32,512], index: 3, kind: output, shape index: {0}]
  %s4 = inlined_call_operand.vmem [shape: f32[2,32,2], index: 4, kind: output, shape index: {1}]
  %5 = xla_tuple %s3, %s4
  %s6 = sld [smem:[#allocation0]]
  $region72: #{upsample_forward.1} parent=0
    _
  %s8 = ssub.s32 1, %s6
  %s9 = scalar_select 0, %s8, %s6
  $region1: #{upsample_forward.1} parent=0
    #allocation2 [shape = 'u8[65536]{0}', space=vmem, size = 0x10000, scoped, tag = 'output window, operand 0']
    loop: start=0, step=1, limit=4
    $region2: #{upsample_forward.1} parent=1 // loop_pre_header
      _
    $region3: #{upsample_forward.1} parent=1 // loop_header
      %s11 = sphi 0, %s15
      %p12 = scmp.ge.s32.totalorder %s11, 4
      %s21 = sphi 0, %s23
      %s24 = sphi 0, %s21
      %s25 = sphi 0, %s24
      %s41 = sphi 0, %s25
      %s47 = sphi 0, %s49
      %s50 = sphi 0, %s47
      %s51 = sphi 0, %s50
      %s67 = sphi 0, %s51
      %s71 = sphi 0, %s71
      %s73 = sphi 0, %s71
      %s74 = sphi 0, %s73
      %s88 = sphi 0, %s74
      %s94 = sphi 0, %s96
      %s97 = sphi 0, %s94
      %s98 = sphi 0, %s97
      %s114 = sphi 0, %s98
      %s120 = sphi 0, %s122
      %s123 = sphi 0, %s120
      %s124 = sphi 0, %s123
      %s140 = sphi 0, %s124
    $region4: #{upsample_forward.1} parent=1 // loop_header_branch
      %14 = sbr.rel (%p12) target = $region8
    $region5: #{upsample_forward.1} parent=1 // loop_body
      %s16 = ssub.s32 %s11, 1
      %s17 = ssub.s32 %s11, 2
      %s18 = sadd.s32 %s11, 1
      %s19 = ssub.s32 %s11, %s18
      %p20 = scmp.eq.s32.totalorder %s19, 0
      %s22 = sadd.s32 %s21, 1
      %s23 = scalar_select %p20, %s21, %s22
      %p26 = pneg %p20
      %p27 = scmp.eq.s32.totalorder %s11, 1
      %p28 = por %p26, %p27
      %p29 = scmp.ne.s32.totalorder %s21, %s24
      %p30 = scmp.eq.s32.totalorder %s11, 0
      %p31 = por %p29, %p30
      %p32 = scmp.ne.s32.totalorder %s21, %s24
      %p33 = scmp.eq.s32.totalorder %s16, 1
      %p34 = por %p32, %p33
      %p35 = scmp.ne.s32.totalorder %s24, %s25
      %p36 = scmp.eq.s32.totalorder %s16, 0
      %p37 = por %p35, %p36
      %p38 = scmp.ne.s32.totalorder %s24, %s25
      %p39 = scmp.eq.s32.totalorder %s17, 1
      %p40 = por %p38, %p39
      %p42 = scmp.ne.s32.totalorder %s25, %s41
      %p43 = scmp.eq.s32.totalorder %s17, 0
      %p44 = por %p42, %p43
      %s45 = ssub.s32 %s11, %s18
      %p46 = scmp.eq.s32.totalorder %s45, 0
      %s48 = sadd.s32 %s47, 1
      %s49 = scalar_select %p46, %s47, %s48
      %p52 = pneg %p46
      %p53 = scmp.eq.s32.totalorder %s11, 1
      %p54 = por %p52, %p53
      %p55 = scmp.ne.s32.totalorder %s47, %s50
      %p56 = scmp.eq.s32.totalorder %s11, 0
      %p57 = por %p55, %p56
      %p58 = scmp.ne.s32.totalorder %s47, %s50
      %p59 = scmp.eq.s32.totalorder %s16, 1
      %p60 = por %p58, %p59
      %p61 = scmp.ne.s32.totalorder %s50, %s51
      %p62 = scmp.eq.s32.totalorder %s16, 0
      %p63 = por %p61, %p62
      %p64 = scmp.ne.s32.totalorder %s50, %s51
      %p65 = scmp.eq.s32.totalorder %s17, 1
      %p66 = por %p64, %p65
      %p68 = scmp.ne.s32.totalorder %s51, %s67
      %p69 = scmp.eq.s32.totalorder %s17, 0
      %p70 = por %p68, %p69
      %s72 = sadd.s32 %s71, 1
      %p75 = scmp.eq.s32.totalorder %s11, 1
      %p76 = scmp.ne.s32.totalorder %s71, %s73
      %p77 = scmp.eq.s32.totalorder %s11, 0
      %p78 = por %p76, %p77
      %p79 = scmp.ne.s32.totalorder %s71, %s73
      %p80 = scmp.eq.s32.totalorder %s16, 1
      %p81 = por %p79, %p80
      %p82 = scmp.ne.s32.totalorder %s73, %s74
      %p83 = scmp.eq.s32.totalorder %s16, 0
      %p84 = por %p82, %p83
      %p85 = scmp.ne.s32.totalorder %s73, %s74
      %p86 = scmp.eq.s32.totalorder %s17, 1
      %p87 = por %p85, %p86
      %p89 = scmp.ne.s32.totalorder %s74, %s88
      %p90 = scmp.eq.s32.totalorder %s17, 0
      %p91 = por %p89, %p90
      %s92 = ssub.s32 %s11, %s18
      %p93 = scmp.eq.s32.totalorder %s92, 0
      %s95 = sadd.s32 %s94, 1
      %s96 = scalar_select %p93, %s94, %s95
      %p99 = pneg %p93
      %p100 = scmp.eq.s32.totalorder %s11, 1
      %p101 = por %p99, %p100
      %p102 = scmp.ne.s32.totalorder %s94, %s97
      %p103 = scmp.eq.s32.totalorder %s11, 0
      %p104 = por %p102, %p103
      %p105 = scmp.ne.s32.totalorder %s94, %s97
      %p106 = scmp.eq.s32.totalorder %s16, 1
      %p107 = por %p105, %p106
      %p108 = scmp.ne.s32.totalorder %s97, %s98
      %p109 = scmp.eq.s32.totalorder %s16, 0
      %p110 = por %p108, %p109
      %p111 = scmp.ne.s32.totalorder %s97, %s98
      %p112 = scmp.eq.s32.totalorder %s17, 1
      %p113 = por %p111, %p112
      %p115 = scmp.ne.s32.totalorder %s98, %s114
      %p116 = scmp.eq.s32.totalorder %s17, 0
      %p117 = por %p115, %p116
      %s118 = ssub.s32 %s11, %s18
      %p119 = scmp.eq.s32.totalorder %s118, 0
      %s121 = sadd.s32 %s120, 1
      %s122 = scalar_select %p119, %s120, %s121
      %p125 = pneg %p119
      %p126 = scmp.eq.s32.totalorder %s11, 1
      %p127 = por %p125, %p126
      %p128 = scmp.ne.s32.totalorder %s120, %s123
      %p129 = scmp.eq.s32.totalorder %s11, 0
      %p130 = por %p128, %p129
      %p131 = scmp.ne.s32.totalorder %s120, %s123
      %p132 = scmp.eq.s32.totalorder %s16, 1
      %p133 = por %p131, %p132
      %p134 = scmp.ne.s32.totalorder %s123, %s124
      %p135 = scmp.eq.s32.totalorder %s16, 0
      %p136 = por %p134, %p135
      %p137 = scmp.ne.s32.totalorder %s123, %s124
      %p138 = scmp.eq.s32.totalorder %s17, 1
      %p139 = por %p137, %p138
      %p141 = scmp.ne.s32.totalorder %s124, %s140
      %p142 = scmp.eq.s32.totalorder %s17, 0
      %p143 = por %p141, %p142
      %p144 = scmp.le.s32.totalorder 1, %s11
      %p145 = scmp.lt.s32.totalorder %s11, 3
      %p146 = pnand %p144, %p145
      %p147 = pneg %p146
      // Predicated region
      $region9: #{upsample_forward.1} parent=5 // pred_check
        _
      $region10: #{upsample_forward.1} parent=5 // pred_check_branch
        %149 = sbr.rel (%p146) target = $region12
      $region11: #{upsample_forward.1} parent=5 // pred_region
        %s150 = ssub.s32 %s11, 1
        // Predicated region
        $region13: #{upsample_forward.1} parent=11 // pred_check
          %p151 = pneg %p84
        $region14: #{upsample_forward.1} parent=11 // pred_check_branch
          %153 = sbr.rel (%p151) target = $region16
        $region15: #{upsample_forward.1} parent=11 // pred_region
          _
        $region16: #{upsample_forward.1} parent=11 // pred_fallthru
          _
      $region12: #{upsample_forward.1} parent=5 // pred_fallthru
        _
      %p154 = scmp.lt.s32.totalorder %s11, 2
      // Predicated region
      $region17: #{upsample_forward.1} parent=5 // pred_check
        %p155 = pneg %p154
      $region18: #{upsample_forward.1} parent=5 // pred_check_branch
        %157 = sbr.rel (%p155) target = $region20
      $region19: #{upsample_forward.1} parent=5 // pred_region
        // Predicated region
        $region21: #{upsample_forward.1} parent=19 // pred_check
          %p158 = pneg %p31
        $region22: #{upsample_forward.1} parent=19 // pred_check_branch
          %160 = sbr.rel (%p158) target = $region24
        $region23: #{upsample_forward.1} parent=19 // pred_region
          %s161 = smul.u32 2, %s11
          %p162 = scmp.lt.s32.totalorder %s161, 3
          %s163 = scalar_select %p162, %s161, 3
          %s164 = smul.addr %s163, 4
          %s165 = scalar_lea.vmem %s0, %s164
          %s166 = smul.u32 2, %s11
        $region24: #{upsample_forward.1} parent=19 // pred_fallthru
          _
        // Predicated region
        $region25: #{upsample_forward.1} parent=19 // pred_check
          %p167 = pneg %p57
        $region26: #{upsample_forward.1} parent=19 // pred_check_branch
          %169 = sbr.rel (%p167) target = $region28
        $region27: #{upsample_forward.1} parent=19 // pred_region
          %s170 = smul.u32 2, %s11
          %p171 = scmp.lt.s32.totalorder %s170, 3
          %s172 = scalar_select %p171, %s170, 3
          %s173 = smul.addr %s172, 4
          %s174 = scalar_lea.vmem %s1, %s173
          %s175 = smul.u32 2, %s11
        $region28: #{upsample_forward.1} parent=19 // pred_fallthru
          _
      $region20: #{upsample_forward.1} parent=5 // pred_fallthru
        _
      %p176 = scmp.le.s32.totalorder 1, %s11
      %p177 = scmp.lt.s32.totalorder %s11, 3
      %p178 = pnand %p176, %p177
      %p179 = pneg %p178
      // Predicated region
      $region29: #{upsample_forward.1} parent=5 // pred_check
        _
      $region30: #{upsample_forward.1} parent=5 // pred_check_branch
        %181 = sbr.rel (%p178) target = $region32
      $region31: #{upsample_forward.1} parent=5 // pred_region
        %s182 = ssub.s32 %s11, 1
        %s183 = smul.u32 2, %s16
        %p184 = scmp.lt.s32.totalorder %s183, 3
        %s185 = scalar_select %p184, %s183, 3
        %s186 = smul.addr %s185, 4
        %s187 = scalar_lea.vmem %s0, %s186
        %p188 = pneg %p37
        %p189 = pneg %p34
        %s190 = smul.u32 2, %s16
        %p191 = scmp.lt.s32.totalorder %s190, 3
        %s192 = scalar_select %p191, %s190, 3
        %s193 = smul.addr %s192, 4
        %s194 = scalar_lea.vmem %s1, %s193
        %p195 = pneg %p63
        %p196 = pneg %p60
        %p197 = pneg %p84
        %p198 = pneg %p81
        %p199 = pneg %p110
        %p200 = pneg %p107
        %s201 = sand.u32 %s97, 1
        %s202 = sand.u32 %s97, 1
        %s203 = smul.addr %s202, 64
        %s204 = scalar_lea.vmem [#allocation2], %s203
        %p205 = pneg %p136
        %p206 = pneg %p133
        %p207 = scmp.lt.s32.totalorder %s16, 1
        %s208 = scalar_select %p207, %s16, 1
        %s209 = smul.addr %s208, 4
        %s210 = smul.addr %s209, 8
        %s211 = scalar_lea.vmem %s4, %s210
        %s212 = smul.u32 2, %s16
        %p213 = scmp.lt.s32.totalorder %s212, 3
        %s214 = scalar_select %p213, %s212, 3
        %s215 = smul.addr %s214, 4
        %s216 = scalar_lea.vmem %s0, %s215
        %s217 = smul.u32 2, %s16
        %s218 = smul.u32 2, %s16
        %p219 = scmp.lt.s32.totalorder %s218, 3
        %s220 = scalar_select %p219, %s218, 3
        %s221 = smul.addr %s220, 4
        %s222 = scalar_lea.vmem %s1, %s221
        %s223 = smul.u32 2, %s16
        %s224 = smul.u32 2, %s16
        %p225 = scmp.lt.s32.totalorder %s16, 1
        %s226 = scalar_select %p225, %s16, 1
        %s227 = smul.addr %s226, 4
        %s228 = smul.addr %s227, 8
        %s229 = scalar_lea.vmem %s4, %s228
        %v230 = vld [vmem:[%s216] sm:$0xff]
        %v231 = vld [vmem:[%s222] sm:$0xff]
        %v232 = vlaneseq
        %v233 = vand.u32 %v232, 127
        %v234 = vadd.s32 %v233, 128
        %vm235 = vcmp.lt.s32.totalorder %v233, 0
        %v236 = vsub.s32 0, %v233
        %v237 = vsel %vm235, %v236, %v233
        %v238 = vshrl.u32 %v237, 4
        %v239 = vand.u32 %v237, 15
        %v240 = vsub.s32 0, %v239
        %v241 = vsel %vm235, %v240, %v239
        %vm242 = vcmp.lt.s32.totalorder %v234, 0
        %v243 = vsub.s32 0, %v234
        %v244 = vsel %vm242, %v243, %v234
        %v245 = vshrl.u32 %v244, 4
        %v246 = vand.u32 %v244, 15
        %v247 = vsub.s32 0, %v246
        %v248 = vsel %vm242, %v247, %v246
        %vm249 = vcmp.ne.s32.totalorder %v241, 0
        %vm250 = vcmp.ne.s32.totalorder %v248, 0
        %vm251 = vcmp.lt.s32.totalorder %v241, 0
        %vm252 = vcmp.lt.s32.totalorder %v248, 0
        %vm253 = vmand %vm251, %vm249
        %vm254 = vmand %vm252, %vm250
        %v255 = vadd.s32 %v241, 16
        %v256 = vadd.s32 %v248, 16
        %v257 = vsel %vm253, %v255, %v241
        %v258 = vsel %vm254, %v256, %v248
        %vm259 = vcmp.ne.s32.totalorder %v257, 15
        %vm260 = vcmp.ne.s32.totalorder %v258, 15
        %262 = vst [vmem:[#allocation1] ss:$2 sm:$0xff] %v230
        %v263 = vld.sshfl [vmem:[#allocation1] sm:$0xff pattern:$0x75316420]
        %v264 = vld.sshfl [vmem:[#allocation1 + $0x8] sm:$0xff pattern:$0x75316420]
        %265 = vrot.lane.b32.xlu0 %v263, 127
        %v266 = vpop.permute.xlu0 %265
        %267 = vrot.lane.b32.xlu0 %v264, 127
        %v268 = vpop.permute.xlu0 %267
        %vm269 = vcmask 1039360
        %v270 = vsel %vm269, %v266, %v268
        %273 = vst [vmem:[#allocation1] ss:$2 sm:$0xff] %v230
        %v274 = vld.sshfl [vmem:[#allocation1] sm:$0xff pattern:$0x75316420]
        %275 = vrot.lane.b32.xlu0 %v274, 127
        %v276 = vpop.permute.xlu0 %275
        %v278 = vsel %vm269, %v268, %v276
        %v279 = vsel %vm259, 1, 0
        %v280 = vsel %vm260, 1, 0
        %vm281 = vcmp.eq.s32.totalorder %v279, 1
        %vm282 = vcmp.eq.s32.totalorder %v280, 1
        %v283 = vsel %vm281, %v270, 0.0
        %v284 = vsel %vm282, %v278, 0.0
        %286 = vst [vmem:[#allocation1] ss:$2 sm:$0xff] %v231
        %v287 = vld.sshfl [vmem:[#allocation1] sm:$0xff pattern:$0x75316420]
        %v288 = vld.sshfl [vmem:[#allocation1 + $0x8] sm:$0xff pattern:$0x75316420]
        %289 = vrot.lane.b32.xlu0 %v287, 127
        %v290 = vpop.permute.xlu0 %289
        %291 = vrot.lane.b32.xlu0 %v288, 127
        %v292 = vpop.permute.xlu0 %291
        %v293 = vsel %vm269, %v290, %v292
        %296 = vst [vmem:[#allocation1] ss:$2 sm:$0xff] %v231
        %v297 = vld.sshfl [vmem:[#allocation1] sm:$0xff pattern:$0x75316420]
        %298 = vrot.lane.b32.xlu0 %v297, 127
        %v299 = vpop.permute.xlu0 %298
        %v301 = vsel %vm269, %v292, %v299
        %v302 = vsel %vm281, %v293, 0.0
        %v303 = vsel %vm282, %v301, 0.0
        %304 = vst [vmem:[#allocation1] ss:$2 sm:$0xff] %v230
        %v305 = vld.sshfl [vmem:[#allocation1] sm:$0xff pattern:$0x75316420]
        %v306 = vld.sshfl [vmem:[#allocation1 + $0x8] sm:$0xff pattern:$0x75316420]
        %v311 = vrot.slane %v283, 4
        %v312 = vrot.slane %v284, 4
        %315 = vst [vmem:[#allocation1] ss:$2 sm:$0xff] %v231
        %v316 = vld.sshfl [vmem:[#allocation1] sm:$0xff pattern:$0x75316420]
        %v317 = vld.sshfl [vmem:[#allocation1 + $0x8] sm:$0xff pattern:$0x75316420]
        %v322 = vrot.slane %v302, 4
        %v323 = vrot.slane %v303, 4
        %vm326 = vcmask 1043456
        %v327 = vsel %vm326, %v305, %v311
        %v328 = vsel %vm326, %v306, %v312
        %v329 = vsel %vm326, %v316, %v322
        %v330 = vsel %vm326, %v317, %v323
        %v331 = vld [vmem:[%s2] sm:$0xff]
        %v332 = vld [vmem:[%s2 + $0x8] sm:$0xff]
        %v333 = vld [vmem:[%s2 + $0x10] sm:$0xff]
        %v334 = vld [vmem:[%s2 + $0x18] sm:$0xff]
        %vm335 = vcmask 138240
        %v337 = vsel %vm335, %v331, 0
        %v340 = vsel %vm335, %v332, 0
        %v343 = vsel %vm335, %v333, 0
        %v346 = vsel %vm335, %v334, 0
        %vm348 = vcmask 1040384
        %v350 = vsel %vm348, 1.0, 0
        %352 = vmatpush.msra.mxu0 0.0
        %353 = vmatpush.msra.mxu0 0.0
        %354 = vmatpush.msra.mxu0 0.0
        %355 = vmatpush.msra.mxu0 0.0
        %356 = vmatpush.msra.mxu0 0.0
        %357 = vmatpush.msra.mxu0 0.0
        %358 = vmatpush.msra.mxu0 0.0
        %359 = vmatpush.msra.mxu0 0.0
        %360 = vmatpush.msra.mxu0 0.0
        %361 = vmatpush.msra.mxu0 0.0
        %362 = vmatpush.msra.mxu0 0.0
        %363 = vmatpush.msra.mxu0 0.0
        %364 = vmatpush.msra.mxu0 0.0
        %365 = vmatpush.msra.mxu0 %v350
        %366 = vmatpush.msra.mxu0 %v329
        %367 = vmatpush.msra.mxu0 %v327
        %368 = vmatmul.f32.gmra.mxu0 %v337
        %v369 = vpop.f32.mrf.mxu0
        %v370 = vadd.f32 0.0, %v369
        %371 = vmatmul.f32.gmra.mxu0 %v340
        %v372 = vpop.f32.mrf.mxu0
        %v373 = vadd.f32 0.0, %v372
        %374 = vmatmul.f32.gmra.mxu0 %v343
        %v375 = vpop.f32.mrf.mxu0
        %v376 = vadd.f32 0.0, %v375
        %377 = vmatmul.f32.gmra.mxu0 %v346
        %v378 = vpop.f32.mrf.mxu0
        %v379 = vadd.f32 0.0, %v378
        %380 = vdwg.mxu0
        %381 = vmatpush.msra.mxu0 0.0
        %382 = vmatpush.msra.mxu0 0.0
        %383 = vmatpush.msra.mxu0 0.0
        %384 = vmatpush.msra.mxu0 0.0
        %385 = vmatpush.msra.mxu0 0.0
        %386 = vmatpush.msra.mxu0 0.0
        %387 = vmatpush.msra.mxu0 0.0
        %388 = vmatpush.msra.mxu0 0.0
        %389 = vmatpush.msra.mxu0 0.0
        %390 = vmatpush.msra.mxu0 0.0
        %391 = vmatpush.msra.mxu0 0.0
        %392 = vmatpush.msra.mxu0 0.0
        %393 = vmatpush.msra.mxu0 0.0
        %394 = vmatpush.msra.mxu0 %v350
        %395 = vmatpush.msra.mxu0 %v330
        %396 = vmatpush.msra.mxu0 %v328
        %397 = vmatmul.f32.gmra.mxu0 %v337
        %v398 = vpop.f32.mrf.mxu0
        %v399 = vadd.f32 0.0, %v398
        %400 = vmatmul.f32.gmra.mxu0 %v340
        %v401 = vpop.f32.mrf.mxu0
        %v402 = vadd.f32 0.0, %v401
        %403 = vmatmul.f32.gmra.mxu0 %v343
        %v404 = vpop.f32.mrf.mxu0
        %v405 = vadd.f32 0.0, %v404
        %406 = vmatmul.f32.gmra.mxu0 %v346
        %v407 = vpop.f32.mrf.mxu0
        %v408 = vadd.f32 0.0, %v407
        %409 = vdwg.mxu0
        %vm410 = vcmp.ge.f32.partialorder %v370, 0.0
        %vm411 = vcmp.ge.f32.partialorder %v399, 0.0
        %vm412 = vcmp.ge.f32.partialorder %v373, 0.0
        %vm413 = vcmp.ge.f32.partialorder %v402, 0.0
        %vm414 = vcmp.ge.f32.partialorder %v376, 0.0
        %vm415 = vcmp.ge.f32.partialorder %v405, 0.0
        %vm416 = vcmp.ge.f32.partialorder %v379, 0.0
        %vm417 = vcmp.ge.f32.partialorder %v408, 0.0
        %v418 = vmul.f32 %v370, 0.01
        %v419 = vmul.f32 %v399, 0.01
        %v420 = vmul.f32 %v373, 0.01
        %v421 = vmul.f32 %v402, 0.01
        %v422 = vmul.f32 %v376, 0.01
        %v423 = vmul.f32 %v405, 0.01
        %v424 = vmul.f32 %v379, 0.01
        %v425 = vmul.f32 %v408, 0.01
        %v426 = vsel %vm410, %v370, %v418
        %v427 = vsel %vm411, %v399, %v419
        %v428 = vsel %vm412, %v373, %v420
        %v429 = vsel %vm413, %v402, %v421
        %v430 = vsel %vm414, %v376, %v422
        %v431 = vsel %vm415, %v405, %v423
        %v432 = vsel %vm416, %v379, %v424
        %v433 = vsel %vm417, %v408, %v425
        %434 = vst [vmem:[%s204] sm:$0xff] %v426
        %435 = vst [vmem:[%s204 + $0x8] sm:$0xff] %v427
        %436 = vst [vmem:[%s204 + $0x10] sm:$0xff] %v428
        %437 = vst [vmem:[%s204 + $0x18] sm:$0xff] %v429
        %438 = vst [vmem:[%s204 + $0x20] sm:$0xff] %v430
        %439 = vst [vmem:[%s204 + $0x28] sm:$0xff] %v431
        %440 = vst [vmem:[%s204 + $0x30] sm:$0xff] %v432
        %441 = vst [vmem:[%s204 + $0x38] sm:$0xff] %v433
        %v442 = vadd.f32 %v426, %v427
        %443 = vadd.xlane.f32.xlu0 %v442
        %v444 = vpop.xlane.xlu0 %443
        %v445 = vadd.f32 %v428, %v429
        %446 = vadd.xlane.f32.xlu0 %v445
        %v447 = vpop.xlane.xlu0 %446
        %v448 = vadd.f32 %v430, %v431
        %449 = vadd.xlane.f32.xlu0 %v448
        %v450 = vpop.xlane.xlu0 %449
        %v451 = vadd.f32 %v432, %v433
        %452 = vadd.xlane.f32.xlu0 %v451
        %v453 = vpop.xlane.xlu0 %452
        %v454 = vmul.f32 %v444, 0.00390625
        %v455 = vmul.f32 %v447, 0.00390625
        %v456 = vmul.f32 %v450, 0.00390625
        %v457 = vmul.f32 %v453, 0.00390625
        %v458 = vsub.f32 %v426, %v454
        %v459 = vsub.f32 %v427, %v454
        %v460 = vsub.f32 %v428, %v455
        %v461 = vsub.f32 %v429, %v455
        %v462 = vsub.f32 %v430, %v456
        %v463 = vsub.f32 %v431, %v456
        %v464 = vsub.f32 %v432, %v457
        %v465 = vsub.f32 %v433, %v457
        %v466 = vmul.f32 %v458, %v458
        %v467 = vmul.f32 %v459, %v459
        %v468 = vmul.f32 %v460, %v460
        %v469 = vmul.f32 %v461, %v461
        %v470 = vmul.f32 %v462, %v462
        %v471 = vmul.f32 %v463, %v463
        %v472 = vmul.f32 %v464, %v464
        %v473 = vmul.f32 %v465, %v465
        %v474 = vadd.f32 %v466, %v467
        %475 = vadd.xlane.f32.xlu0 %v474
        %v476 = vpop.xlane.xlu0 %475
        %v477 = vadd.f32 %v468, %v469
        %478 = vadd.xlane.f32.xlu0 %v477
        %v479 = vpop.xlane.xlu0 %478
        %v480 = vadd.f32 %v470, %v471
        %481 = vadd.xlane.f32.xlu0 %v480
        %v482 = vpop.xlane.xlu0 %481
        %v483 = vadd.f32 %v472, %v473
        %484 = vadd.xlane.f32.xlu0 %v483
        %v485 = vpop.xlane.xlu0 %484
        %vm486 = vcmask 7168
        %v487 = vsel %vm486, %v444, %v476
        %v488 = vsel %vm486, %v447, %v479
        %v489 = vsel %vm486, %v450, %v482
        %v490 = vsel %vm486, %v453, %v485
        %vm491 = vcmask 15360
        %492 = vst.msk [vmem:[%s229] sm:$0xff] %vm491, %v487
        %493 = vst.msk [vmem:[%s229 + $0x8] sm:$0xff] %vm491, %v488
        %494 = vst.msk [vmem:[%s229 + $0x10] sm:$0xff] %vm491, %v489
        %495 = vst.msk [vmem:[%s229 + $0x18] sm:$0xff] %vm491, %v490
        %s496 = sand.u32 %s97, 1
        %s497 = sand.u32 %s97, 1
        %s498 = smul.addr %s497, 64
        %s499 = scalar_lea.vmem [#allocation2], %s498
        %p500 = scmp.lt.s32.totalorder %s16, 1
        %s501 = scalar_select %p500, %s16, 1
        %s502 = smul.addr %s501, 4
        %s503 = smul.addr %s502, 8
        %s504 = scalar_lea.vmem %s4, %s503
        // Predicated region
        $region33: #{upsample_forward.1} parent=31 // pred_check
          %p505 = pneg %p107
        $region34: #{upsample_forward.1} parent=31 // pred_check_branch
          %507 = sbr.rel (%p505) target = $region36
        $region35: #{upsample_forward.1} parent=31 // pred_region
          %s508 = smul.u32 2, %s16
          %s509 = smul.addr %s508, 8
          %s510 = scalar_lea.vmem %s3, %s509
          // Predicated region
          $region37: #{upsample_forward.1} parent=35 // pred_check
            _
          $region38: #{upsample_forward.1} parent=35 // pred_check_branch
            %512 = sbr.rel (0) target = $region40
          $region39: #{upsample_forward.1} parent=35 // pred_region
            // Predicated region
            $region41: #{upsample_forward.1} parent=39 // pred_check
              _
            $region42: #{upsample_forward.1} parent=39 // pred_check_branch
              %514 = sbr.rel (0) target = $region44
            $region43: #{upsample_forward.1} parent=39 // pred_region
              loop: start=0, step=1, limit=1
              $region45: #{upsample_forward.1} parent=43 // loop_pre_header
                _
              $region46: #{upsample_forward.1} parent=43 // loop_header
                %s516 = sphi 0, %s520
                %p517 = scmp.ge.s32.totalorder %s516, 1
                %s521 = sphi %s499, %s499
                %s522 = sphi %s510, %s510
              $region47: #{upsample_forward.1} parent=43 // loop_header_branch
                %519 = sbr.rel (%p517) target = $region51
              $region48: #{upsample_forward.1} parent=43 // loop_body
                %v523 = vld [vmem:[%s521] sm:$0xff]
                %524 = vst [vmem:[%s522] sm:$0xff] %v523
                %v525 = vld [vmem:[%s521 + $0x8] sm:$0xff]
                %526 = vst [vmem:[%s522 + $0x8] sm:$0xff] %v525
                %v527 = vld [vmem:[%s521 + $0x10] sm:$0xff]
                %528 = vst [vmem:[%s522 + $0x20] sm:$0xff] %v527
                %v529 = vld [vmem:[%s521 + $0x18] sm:$0xff]
                %530 = vst [vmem:[%s522 + $0x28] sm:$0xff] %v529
                %v531 = vld [vmem:[%s521 + $0x20] sm:$0xff]
                %532 = vst [vmem:[%s522 + $0x40] sm:$0xff] %v531
                %v533 = vld [vmem:[%s521 + $0x28] sm:$0xff]
                %534 = vst [vmem:[%s522 + $0x48] sm:$0xff] %v533
                %v535 = vld [vmem:[%s521 + $0x30] sm:$0xff]
                %536 = vst [vmem:[%s522 + $0x60] sm:$0xff] %v535
                %v537 = vld [vmem:[%s521 + $0x38] sm:$0xff]
                %538 = vst [vmem:[%s522 + $0x68] sm:$0xff] %v537
              $region49: #{upsample_forward.1} parent=43 // loop_footer
                %s520 = sadd.s32 1, %s516
              $region50: #{upsample_forward.1} parent=43 // loop_footer_branch
                %515 = sbr.rel target = $region46
              $region51: #{upsample_forward.1} parent=43 // loop_exit
                _
            $region44: #{upsample_forward.1} parent=39 // pred_fallthru
              _
            // Predicated region
            $region52: #{upsample_forward.1} parent=39 // pred_check
              _
            $region53: #{upsample_forward.1} parent=39 // pred_check_branch
              %540 = sbr.rel target = $region55
            $region54: #{upsample_forward.1} parent=39 // pred_region
              _
            $region55: #{upsample_forward.1} parent=39 // pred_fallthru
              _
          $region40: #{upsample_forward.1} parent=35 // pred_fallthru
            _
          %541 = vnop
        $region36: #{upsample_forward.1} parent=31 // pred_fallthru
          _
        // Predicated region
        $region56: #{upsample_forward.1} parent=31 // pred_check
          %p542 = pneg %p133
        $region57: #{upsample_forward.1} parent=31 // pred_check_branch
          %544 = sbr.rel (%p542) target = $region59
        $region58: #{upsample_forward.1} parent=31 // pred_region
          _
        $region59: #{upsample_forward.1} parent=31 // pred_fallthru
          _
      $region32: #{upsample_forward.1} parent=5 // pred_fallthru
        _
      %p545 = scmp.le.s32.totalorder 2, %s11
      // Predicated region
      $region60: #{upsample_forward.1} parent=5 // pred_check
        %p546 = pneg %p545
      $region61: #{upsample_forward.1} parent=5 // pred_check_branch
        %548 = sbr.rel (%p546) target = $region63
      $region62: #{upsample_forward.1} parent=5 // pred_region
        %s549 = ssub.s32 %s11, 2
        // Predicated region
        $region64: #{upsample_forward.1} parent=62 // pred_check
          %p550 = pneg %p113
        $region65: #{upsample_forward.1} parent=62 // pred_check_branch
          %552 = sbr.rel (%p550) target = $region67
        $region66: #{upsample_forward.1} parent=62 // pred_region
          %s553 = sand.u32 %s98, 1
          %s554 = sand.u32 %s98, 1
          %s555 = smul.addr %s554, 64
          %s556 = scalar_lea.vmem [#allocation2], %s555
        $region67: #{upsample_forward.1} parent=62 // pred_fallthru
          _
        // Predicated region
        $region68: #{upsample_forward.1} parent=62 // pred_check
          %p557 = pneg %p139
        $region69: #{upsample_forward.1} parent=62 // pred_check_branch
          %559 = sbr.rel (%p557) target = $region71
        $region70: #{upsample_forward.1} parent=62 // pred_region
          %p560 = scmp.lt.s32.totalorder %s17, 1
          %s561 = scalar_select %p560, %s17, 1
          %s562 = smul.addr %s561, 4
          %s563 = smul.addr %s562, 8
          %s564 = scalar_lea.vmem %s4, %s563
        $region71: #{upsample_forward.1} parent=62 // pred_fallthru
          _
      $region63: #{upsample_forward.1} parent=5 // pred_fallthru
        _
    $region6: #{upsample_forward.1} parent=1 // loop_footer
      %s15 = sadd.s32 1, %s11
    $region7: #{upsample_forward.1} parent=1 // loop_footer_branch
      %10 = sbr.rel target = $region3
    $region8: #{upsample_forward.1} parent=1 // loop_exit
      _

</llo_original>
